<compile_context>
chip_gen: v6e
topology: v6e:2x2x1
jax: 0.10.0
libtpu: 0.0.40
codegen_flags: <defaults>
</compile_context>

<pallas_src>
import math
import numpy as np
import jax
import jax.numpy as jnp
from jax import lax
from jax.experimental import pallas as pl
from jax.experimental.pallas import tpu as pltpu

F32 = jnp.float32
MXDT = jnp.bfloat16          # MXU operand dtype (review item: bf16 operands, f32 acc)
EPS = 1e-5
VMEM_LIMIT = 32 * 1024 * 1024


# ----------------------------- in-kernel helpers -----------------------------
def _mm(a, b):
    """MXU matmul: bf16 operands, f32 accumulation."""
    return jnp.dot(a.astype(MXDT), b.astype(MXDT), preferred_element_type=F32)


def _sigmoid(x):
    # overflow-safe, EUP-friendly (tanh) sigmoid
    return 0.5 * (jnp.tanh(0.5 * x) + 1.0)


def _softplus(x):
    return jnp.maximum(x, 0.0) + jnp.log(1.0 + jnp.exp(-jnp.abs(x)))


def _layernorm(x, g, b):
    mu = jnp.mean(x, axis=-1, keepdims=True)
    xc = x - mu
    var = jnp.mean(xc * xc, axis=-1, keepdims=True)
    return xc * lax.rsqrt(var + EPS) * g + b


# --------------------------------- kernel 1 -----------------------------------
def spatial_stack_kernel(src_ref, dst_ref,                        # scalar prefetch (SMEM)
                         x_ref, ea_ref,
                         w1ij_ref, w1e_ref, b1_ref, g1_ref, be1_ref,
                         w2_ref, b2_ref, fng_ref, fnb_ref,
                         pe_ref,                                   # output, VMEM-resident
                         ebias_sc, tij_sc, hpre_sc, msg_sc, acc_sc):
    """All spatial_convs iterations in one call (grid=(spatial_convs,), arbitrary).

    pe lives in the resident output block across grid steps.  Gather / scatter-add
    are index-driven row copies (SMEM edge indices), O(E*H).  The loop-invariant
    edge_attr term of the first MLP layer is cached in scratch at step 0.
    """
    n_nodes, hidden = x_ref.shape
    n_edges = ea_ref.shape[0]
    it = pl.program_id(0)

    @pl.when(it == 0)
    def _init():
        pe_ref[...] = x_ref[...]
        ebias_sc[...] = _mm(ea_ref[...], w1e_ref[...]) + b1_ref[...]

    pe = pe_ref[...]                                               # [N, H]

    # fused first-layer node projections: [pe@W1i | pe@W1j] in ONE wide MXU op
    tij_sc[...] = _mm(pe, w1ij_ref[...])                           # [N, 2H]

    # index-driven edge gather (x_i from dst, x_j from src), O(E*H)
    def _gather(e, carry):
        d = dst_ref[e]
        s = src_ref[e]
        hpre_sc[pl.ds(e, 1), :] = (tij_sc[pl.ds(d, 1), pl.ds(0, hidden)]
                                   + tij_sc[pl.ds(s, 1), pl.ds(hidden, hidden)])
        return carry
    lax.fori_loop(0, n_edges, _gather, 0)

    h = hpre_sc[...] + ebias_sc[...]                               # [E, H]
    h = jnp.maximum(_layernorm(h, g1_ref[...], be1_ref[...]), 0.0)
    msg_sc[...] = _mm(h, w2_ref[...]) + b2_ref[...]                # [E, H]

    # index-driven scatter-add into the per-node accumulator, O(E*H)
    acc_sc[...] = jnp.zeros_like(acc_sc)

    def _scatter(e, carry):
        d = dst_ref[e]
        acc_sc[pl.ds(d, 1), :] = acc_sc[pl.ds(d, 1), :] + msg_sc[pl.ds(e, 1), :]
        return carry
    lax.fori_loop(0, n_edges, _scatter, 0)

    pe_ref[...] = _layernorm(pe + acc_sc[...], fng_ref[...], fnb_ref[...])


# --------------------------------- kernel 2 -----------------------------------
def mamba_merge_kernel(dpos_ref, bidx_ref,                         # scalar prefetch (SMEM)
                       x_ref, pe_ref, theta_ref,
                       winx_ref, winz_ref, convw_ref, convb_ref,
                       wdt_ref, bdt_ref, wxb_ref, wxc_ref,
                       alog_ref, dskip_ref, wout_ref,
                       mgw1_ref, mgb1_ref, mgg1_ref, mgbe1_ref,
                       mgw2_ref, mgb2_ref, lng_ref, lnb_ref,
                       o_ref,
                       xd_sc, xc_sc, mlast_sc, xm_sc):
    n_nodes, hidden = x_ref.shape
    n_graphs, seq_len, d_inner = xc_sc.shape
    n_max = xd_sc.shape[0] // n_graphs
    d_state = wxb_ref.shape[1]
    k_conv = convw_ref.shape[0]
    bt_rows = n_graphs * seq_len

    x = x_ref[...]                                                 # [N, H] (identity)

    # ---- to_dense_batch via index-driven row scatter, O(N*H) ------------------
    xd_sc[...] = jnp.zeros_like(xd_sc)

    def _dense_scatter(n, carry):
        xd_sc[pl.ds(dpos_ref[n], 1), :] = x_ref[pl.ds(n, 1), :]
        return carry
    lax.fori_loop(0, n_nodes, _dense_scatter, 0)

    xd = xd_sc[...]                                                # [B*Nmax, H]
    th = _mm(xd, theta_ref[...])                                   # [B*Nmax, T]
    # alpha_X = theta(x_dense)^T @ x_dense as a per-graph batched contraction
    # (padded rows contribute zero: theta has no bias and padded xd rows are zero).
    uf3 = jnp.einsum('bpt,bph->bth',
                     th.reshape(n_graphs, n_max, seq_len).astype(MXDT),
                     xd.reshape(n_graphs, n_max, hidden).astype(MXDT),
                     preferred_element_type=F32)                   # [B, T, H]
    uf = uf3.reshape(bt_rows, hidden)

    # ---- Mamba in_proj (x branch) + causal depthwise conv + SiLU ---------------
    xin3 = _mm(uf, winx_ref[...]).reshape(n_graphs, seq_len, d_inner)  # [B, T, di]
    conv_w = convw_ref[...]                                            # [K, di]
    xc_sc[...] = jnp.zeros_like(xc_sc)
    for s in range(k_conv):                                # tap applied at time lag s
        k = k_conv - 1 - s
        w_tap = conv_w[k:k + 1, :][None]                   # [1, 1, di]
        if s == 0:
            xc_sc[...] += w_tap * xin3
        else:
            # static sublane-slice accumulate: no concat copies, no cross-graph leak
            xc_sc[:, s:, :] += w_tap * xin3[:, :seq_len - s, :]
    xcv = xc_sc[...] + convb_ref[...][None]                # + conv bias   [B, T, di]
    xcv = xcv * _sigmoid(xcv)                              # SiLU
    xc = xcv.reshape(bt_rows, d_inner)                     # [B*T, di]

    # ---- dt / B projections (dt low-rank projection pre-fused on the host) ----
    dt = _softplus(_mm(xc, wdt_ref[...]) + bdt_ref[...])   # [B*T, di]
    btm = _mm(xc, wxb_ref[...])                            # [B*T, ds]

    # ---- selective scan: exp hoisted out of the loop, loop is pure FMA --------
    a_mat = -jnp.exp(alog_ref[...])                        # [di, ds]
    da_all = jnp.exp(dt.reshape(n_graphs, seq_len, d_inner, 1)
                     * a_mat[None, None])                  # [B, T, di, ds]
    dbx_all = ((dt * xc).reshape(n_graphs, seq_len, d_inner, 1)
               * btm.reshape(n_graphs, seq_len, 1, d_state))   # [B, T, di, ds]
    h = jnp.zeros((n_graphs, d_inner, d_state), F32)
    for t in range(seq_len):                               # tiny static unroll, FMA only
        h = da_all[:, t] * h + dbx_all[:, t]

    # ---- only the last virtual token feeds downstream --------------------------
    xc_last = xcv[:, seq_len - 1, :]                               # [B, di]
    ct_last = _mm(xc_last, wxc_ref[...])                           # [B, ds]
    y = jnp.sum(h * ct_last[:, None, :], axis=-1) + dskip_ref[...] * xc_last
    z_last = _mm(uf3[:, seq_len - 1, :], winz_ref[...])            # [B, di]
    y = y * (z_last * _sigmoid(z_last))                            # silu gate
    mlast_sc[...] = _mm(y, wout_ref[...])                          # [B, H]

    # ---- broadcast per-graph token to its nodes (index gather), merge MLP, LN --
    def _bcast(n, carry):
        xm_sc[pl.ds(n, 1), :] = mlast_sc[pl.ds(bidx_ref[n], 1), :]
        return carry
    lax.fori_loop(0, n_nodes, _bcast, 0)

    cat = jnp.concatenate([pe_ref[...], xm_sc[...]], axis=-1)      # [N, 2H]
    hm = _mm(cat, mgw1_ref[...]) + mgb1_ref[...]                   # fused [2H, H] weight
    hm = jnp.maximum(_layernorm(hm, mgg1_ref[...], mgbe1_ref[...]), 0.0)
    merged = _mm(hm, mgw2_ref[...]) + mgb2_ref[...]
    o_ref[...] = _layernorm(merged + x, lng_ref[...], lnb_ref[...])


# ------------------------------ parameter init --------------------------------
def init_params(key, hidden, num_virtual_tokens, d_state=128, d_conv=4, expand=2):
    d_inner = expand * hidden
    dt_rank = math.ceil(hidden / 16)
    ks = jax.random.split(key, 24)

    def rnd(k, shape, scale=0.1):
        return (scale * jax.random.normal(k, shape)).astype(F32)

    p = {}
    # SpatialConv.node_mlp (weights shared across the 4 spatial-conv applications)
    p['nm_w1i'] = rnd(ks[0], (hidden, hidden))
    p['nm_w1j'] = rnd(ks[1], (hidden, hidden))
    p['nm_w1e'] = rnd(ks[2], (hidden, hidden))
    p['nm_b1'] = jnp.zeros((1, hidden), F32)
    p['nm_g1'] = jnp.ones((1, hidden), F32)
    p['nm_be1'] = jnp.zeros((1, hidden), F32)
    p['nm_w2'] = rnd(ks[3], (hidden, hidden))
    p['nm_b2'] = jnp.zeros((1, hidden), F32)
    # SpatialConv.final_norm
    p['fn_g'] = jnp.ones((1, hidden), F32)
    p['fn_b'] = jnp.zeros((1, hidden), F32)
    # theta: Linear(H, T), bias=False, stored [H, T]
    p['theta_w'] = rnd(ks[4], (hidden, num_virtual_tokens))
    # Mamba
    p['m_winx'] = rnd(ks[5], (hidden, d_inner))
    p['m_winz'] = rnd(ks[6], (hidden, d_inner))
    p['m_convw'] = rnd(ks[7], (d_conv, d_inner))
    p['m_convb'] = rnd(ks[8], (1, d_inner))
    p['m_wxdt'] = rnd(ks[9], (d_inner, dt_rank))
    p['m_wxb'] = rnd(ks[10], (d_inner, d_state))
    p['m_wxc'] = rnd(ks[11], (d_inner, d_state))
    p['m_wdt'] = rnd(ks[12], (dt_rank, d_inner))
    p['m_bdt'] = rnd(ks[13], (1, d_inner))
    p['m_alog'] = jnp.broadcast_to(
        jnp.log(jnp.arange(1, d_state + 1, dtype=F32)), (d_inner, d_state)).astype(F32)
    p['m_dskip'] = jnp.ones((1, d_inner), F32)
    p['m_wout'] = rnd(ks[14], (d_inner, hidden))
    # merge MLP (concat [pe | x_m], first layer split into two H-wide blocks)
    p['mg_w1a'] = rnd(ks[15], (hidden, hidden))
    p['mg_w1b'] = rnd(ks[16], (hidden, hidden))
    p['mg_b1'] = jnp.zeros((1, hidden), F32)
    p['mg_g1'] = jnp.ones((1, hidden), F32)
    p['mg_be1'] = jnp.zeros((1, hidden), F32)
    p['mg_w2'] = rnd(ks[17], (hidden, hidden))
    p['mg_b2'] = jnp.zeros((1, hidden), F32)
    # final layer_norm
    p['ln_g'] = jnp.ones((1, hidden), F32)
    p['ln_b'] = jnp.zeros((1, hidden), F32)
    return p


# --------------------------------- forward ------------------------------------
def multi_scale_gamba_forward(params, x, edge_index, edge_attr, batch, num_graphs,
                              spatial_convs=4):
    n_nodes, hidden = x.shape
    n_edges = edge_attr.shape[0]

    # ---- host-side index bookkeeping (int32 index arrays only, no one-hot ops) ---
    src_idx = jnp.asarray(edge_index[0], jnp.int32)          # x_j source nodes
    dst_idx = jnp.asarray(edge_index[1], jnp.int32)          # x_i / aggregation targets
    batch_np = np.asarray(batch).astype(np.int64)
    counts = np.bincount(batch_np, minlength=num_graphs)
    n_max = int(counts.max())
    pos = np.zeros(n_nodes, np.int64)
    cursor = np.zeros(num_graphs, np.int64)
    for i, b in enumerate(batch_np):
        pos[i] = cursor[b]
        cursor[b] += 1
    dense_pos = jnp.asarray(batch_np * n_max + pos, jnp.int32)  # to_dense_batch row ids
    batch_idx = jnp.asarray(batch_np, jnp.int32)

    # ---- host-side weight fusions (widen degenerate MXU shapes) ------------------
    w1ij = jnp.concatenate([params['nm_w1i'], params['nm_w1j']], axis=1)   # [H, 2H]
    mg_w1 = jnp.concatenate([params['mg_w1a'], params['mg_w1b']], axis=0)  # [2H, H]
    w_dt = jnp.dot(params['m_wxdt'], params['m_wdt'])                      # [di, di]

    def full_spec(shape):
        zero = (0,) * len(shape)
        return pl.BlockSpec(tuple(int(s) for s in shape), lambda *_, z=zero: z)

    # ---- kernel 1: 4x SpatialConv fused into one grid=(4,) call ------------------
    k1_inputs = (x, edge_attr,
                 w1ij, params['nm_w1e'], params['nm_b1'],
                 params['nm_g1'], params['nm_be1'],
                 params['nm_w2'], params['nm_b2'],
                 params['fn_g'], params['fn_b'])
    pe = pl.pallas_call(
        spatial_stack_kernel,
        out_shape=jax.ShapeDtypeStruct((n_nodes, hidden), F32),
        grid_spec=pltpu.PrefetchScalarGridSpec(
            num_scalar_prefetch=2,
            grid=(spatial_convs,),
            in_specs=[full_spec(a.shape) for a in k1_inputs],
            out_specs=full_spec((n_nodes, hidden)),
            scratch_shapes=[pltpu.VMEM((n_edges, hidden), F32),       # ebias (cached)
                            pltpu.VMEM((n_nodes, 2 * hidden), F32),   # [ti | tj]
                            pltpu.VMEM((n_edges, hidden), F32),       # gathered pre-act
                            pltpu.VMEM((n_edges, hidden), F32),       # messages
                            pltpu.VMEM((n_nodes, hidden), F32)]),     # scatter accum
        compiler_params=pltpu.CompilerParams(
            dimension_semantics=("arbitrary",),          # sequential refinement of pe
            vmem_limit_bytes=VMEM_LIMIT),
    )(src_idx, dst_idx, *k1_inputs)

    # ---- kernel 2: dense-batch + alpha_X + Mamba + merge + final LayerNorm -------
    num_vt = params['theta_w'].shape[1]
    d_inner = params['m_winx'].shape[1]
    k2_inputs = (x, pe, params['theta_w'],
                 params['m_winx'], params['m_winz'],
                 params['m_convw'], params['m_convb'],
                 w_dt, params['m_bdt'],
                 params['m_wxb'], params['m_wxc'],
                 params['m_alog'], params['m_dskip'], params['m_wout'],
                 mg_w1, params['mg_b1'], params['mg_g1'], params['mg_be1'],
                 params['mg_w2'], params['mg_b2'],
                 params['ln_g'], params['ln_b'])
    out = pl.pallas_call(
        mamba_merge_kernel,
        out_shape=jax.ShapeDtypeStruct((n_nodes, hidden), F32),
        grid_spec=pltpu.PrefetchScalarGridSpec(
            num_scalar_prefetch=2,
            grid=(1,),
            in_specs=[full_spec(a.shape) for a in k2_inputs],
            out_specs=full_spec((n_nodes, hidden)),
            scratch_shapes=[pltpu.VMEM((num_graphs * n_max, hidden), F32),   # x_dense
                            pltpu.VMEM((num_graphs, num_vt, d_inner), F32),  # conv accum
                            pltpu.VMEM((num_graphs, hidden), F32),           # last token
                            pltpu.VMEM((n_nodes, hidden), F32)]),            # node bcast
        compiler_params=pltpu.CompilerParams(
            dimension_semantics=("arbitrary",),
            vmem_limit_bytes=VMEM_LIMIT),
    )(dense_pos, batch_idx, *k2_inputs)
    return out


# ----------------------------------- main --------------------------------------
if __name__ == "__main__":
    hidden = 32
    num_virtual_tokens = 8
    num_graphs = 2
    nodes_per_graph = 8
    n_nodes = num_graphs * nodes_per_graph
    edges_per_graph = 16
    n_edges = num_graphs * edges_per_graph

    key = jax.random.PRNGKey(0)
    kx, ke, ks, kd, kp = jax.random.split(key, 5)

    x = jax.random.normal(kx, (n_nodes, hidden), F32)
    edge_attr = jax.random.normal(ke, (n_edges, hidden), F32)
    src_r = jax.random.randint(ks, (n_edges,), 0, nodes_per_graph)
    dst_r = jax.random.randint(kd, (n_edges,), 0, nodes_per_graph)
    graph_off = jnp.repeat(jnp.arange(num_graphs) * nodes_per_graph, edges_per_graph)
    edge_index = jnp.stack([src_r + graph_off, dst_r + graph_off], axis=0).astype(jnp.int32)
    batch = jnp.repeat(jnp.arange(num_graphs, dtype=jnp.int32), nodes_per_graph)

    params = init_params(kp, hidden, num_virtual_tokens)

    out = multi_scale_gamba_forward(params, x, edge_index, edge_attr, batch, num_graphs)
    jax.block_until_ready(out)
    assert out.shape == (n_nodes, hidden)
    print("KERNEL_OK")
</pallas_src>

<mosaic_0001>
module attributes {stable_mosaic.version = 11 : i64} {
  func.func @spatial_stack_kernel(%arg0: i32, %arg1: memref<32xi32, #tpu.memory_space<smem>>, %arg2: memref<32xi32, #tpu.memory_space<smem>>, %arg3: memref<16x32xf32, #tpu.memory_space<vmem>>, %arg4: memref<32x32xf32, #tpu.memory_space<vmem>>, %arg5: memref<32x64xf32, #tpu.memory_space<vmem>>, %arg6: memref<32x32xf32, #tpu.memory_space<vmem>>, %arg7: memref<1x32xf32, #tpu.memory_space<vmem>>, %arg8: memref<1x32xf32, #tpu.memory_space<vmem>>, %arg9: memref<1x32xf32, #tpu.memory_space<vmem>>, %arg10: memref<32x32xf32, #tpu.memory_space<vmem>>, %arg11: memref<1x32xf32, #tpu.memory_space<vmem>>, %arg12: memref<1x32xf32, #tpu.memory_space<vmem>>, %arg13: memref<1x32xf32, #tpu.memory_space<vmem>>, %arg14: memref<16x32xf32, #tpu.memory_space<vmem>>, %arg15: memref<32x32xf32, #tpu.memory_space<vmem>>, %arg16: memref<16x64xf32, #tpu.memory_space<vmem>>, %arg17: memref<32x32xf32, #tpu.memory_space<vmem>>, %arg18: memref<32x32xf32, #tpu.memory_space<vmem>>, %arg19: memref<16x32xf32, #tpu.memory_space<vmem>>) attributes {dimension_semantics = [#tpu.dimension_semantics<arbitrary>], iteration_bounds = array<i64: 4>, scalar_prefetch = 2 : i64, scratch_operands = 5 : i64, tpu.core_type = #tpu.core_type<tc>, window_params = [{pipeline_mode = #tpu.pipeline_mode<synchronous>, transform_indices = @transform_0, window_bounds = array<i64: 16, 32>}, {pipeline_mode = #tpu.pipeline_mode<synchronous>, transform_indices = @transform_1, window_bounds = array<i64: 32, 32>}, {pipeline_mode = #tpu.pipeline_mode<synchronous>, transform_indices = @transform_2, window_bounds = array<i64: 32, 64>}, {pipeline_mode = #tpu.pipeline_mode<synchronous>, transform_indices = @transform_3, window_bounds = array<i64: 32, 32>}, {pipeline_mode = #tpu.pipeline_mode<synchronous>, transform_indices = @transform_4, window_bounds = array<i64: 1, 32>}, {pipeline_mode = #tpu.pipeline_mode<synchronous>, transform_indices = @transform_5, window_bounds = array<i64: 1, 32>}, {pipeline_mode = #tpu.pipeline_mode<synchronous>, transform_indices = @transform_6, window_bounds = array<i64: 1, 32>}, {pipeline_mode = #tpu.pipeline_mode<synchronous>, transform_indices = @transform_7, window_bounds = array<i64: 32, 32>}, {pipeline_mode = #tpu.pipeline_mode<synchronous>, transform_indices = @transform_8, window_bounds = array<i64: 1, 32>}, {pipeline_mode = #tpu.pipeline_mode<synchronous>, transform_indices = @transform_9, window_bounds = array<i64: 1, 32>}, {pipeline_mode = #tpu.pipeline_mode<synchronous>, transform_indices = @transform_10, window_bounds = array<i64: 1, 32>}, {pipeline_mode = #tpu.pipeline_mode<synchronous>, transform_indices = @transform_11, window_bounds = array<i64: 16, 32>}]} {
    %c0_i32 = arith.constant 0 : i32
    %0 = arith.cmpi eq, %arg0, %c0_i32 : i32
    %1 = arith.extui %0 : i1 to i32
    %c0_i32_0 = arith.constant 0 : i32
    %2 = arith.cmpi ne, %1, %c0_i32_0 : i32
    scf.if %2 {
      %c0_49 = arith.constant 0 : index
      %c0_50 = arith.constant 0 : index
      %73 = vector.load %arg3[%c0_49, %c0_50] : memref<16x32xf32, #tpu.memory_space<vmem>>, vector<16x32xf32>
      %c0_51 = arith.constant 0 : index
      %c0_52 = arith.constant 0 : index
      %74 = vector.load %arg14[%c0_51, %c0_52] : memref<16x32xf32, #tpu.memory_space<vmem>>, vector<16x32xf32>
      tpu.vector_store %arg14[%c0_51, %c0_52], %73 {strides = array<i32>} : memref<16x32xf32, #tpu.memory_space<vmem>>, vector<16x32xf32>,
      %c0_53 = arith.constant 0 : index
      %c0_54 = arith.constant 0 : index
      %75 = vector.load %arg4[%c0_53, %c0_54] : memref<32x32xf32, #tpu.memory_space<vmem>>, vector<32x32xf32>
      %c0_55 = arith.constant 0 : index
      %c0_56 = arith.constant 0 : index
      %76 = vector.load %arg6[%c0_55, %c0_56] : memref<32x32xf32, #tpu.memory_space<vmem>>, vector<32x32xf32>
      %77 = arith.truncf %75 : vector<32x32xf32> to vector<32x32xbf16>
      %78 = arith.truncf %76 : vector<32x32xf32> to vector<32x32xbf16>
      %cst_57 = arith.constant dense<0.000000e+00> : vector<32x32xf32>
      %79 = tpu.matmul %77, %78, %cst_57 {dimension_numbers = #tpu.dot_dimension_numbers<[1], [0], [0], [1], [0, 0, 1, 1], [], []>} : vector<32x32xbf16>, vector<32x32xbf16>, vector<32x32xf32> -> vector<32x32xf32>
      %c0_58 = arith.constant 0 : index
      %c0_59 = arith.constant 0 : index
      %80 = vector.load %arg7[%c0_58, %c0_59] : memref<1x32xf32, #tpu.memory_space<vmem>>, vector<1x32xf32>
      %81 = vector.broadcast %80 : vector<1x32xf32> to vector<32x32xf32>
      %82 = arith.addf %79, %81 : vector<32x32xf32>
      %c0_60 = arith.constant 0 : index
      %c0_61 = arith.constant 0 : index
      %83 = vector.load %arg15[%c0_60, %c0_61] : memref<32x32xf32, #tpu.memory_space<vmem>>, vector<32x32xf32>
      tpu.vector_store %arg15[%c0_60, %c0_61], %82 {strides = array<i32>} : memref<32x32xf32, #tpu.memory_space<vmem>>, vector<32x32xf32>,
    } else {
    }
    %c0 = arith.constant 0 : index
    %c0_1 = arith.constant 0 : index
    %3 = vector.load %arg14[%c0, %c0_1] : memref<16x32xf32, #tpu.memory_space<vmem>>, vector<16x32xf32>
    %c0_2 = arith.constant 0 : index
    %c0_3 = arith.constant 0 : index
    %4 = vector.load %arg5[%c0_2, %c0_3] : memref<32x64xf32, #tpu.memory_space<vmem>>, vector<32x64xf32>
    %5 = arith.truncf %3 : vector<16x32xf32> to vector<16x32xbf16>
    %6 = arith.truncf %4 : vector<32x64xf32> to vector<32x64xbf16>
    %cst = arith.constant dense<0.000000e+00> : vector<16x64xf32>
    %7 = tpu.matmul %5, %6, %cst {dimension_numbers = #tpu.dot_dimension_numbers<[1], [0], [0], [1], [0, 0, 1, 1], [], []>} : vector<16x32xbf16>, vector<32x64xbf16>, vector<16x64xf32> -> vector<16x64xf32>
    %c0_4 = arith.constant 0 : index
    %c0_5 = arith.constant 0 : index
    %8 = vector.load %arg16[%c0_4, %c0_5] : memref<16x64xf32, #tpu.memory_space<vmem>>, vector<16x64xf32>
    tpu.vector_store %arg16[%c0_4, %c0_5], %7 {strides = array<i32>} : memref<16x64xf32, #tpu.memory_space<vmem>>, vector<16x64xf32>,
    %c0_i32_6 = arith.constant 0 : i32
    %c32_i32 = arith.constant 32 : i32
    %9 = arith.addi %c0_i32_6, %c32_i32 : i32
    %c1_i32 = arith.constant 1 : i32
    scf.for %arg20 = %c0_i32_6 to %9 step %c1_i32  : i32 {
      %73 = arith.index_cast %arg20 : i32 to index
      %74 = memref.load %arg2[%73] : memref<32xi32, #tpu.memory_space<smem>>
      %75 = arith.index_cast %arg20 : i32 to index
      %76 = memref.load %arg1[%75] : memref<32xi32, #tpu.memory_space<smem>>
      %77 = arith.index_cast %74 : i32 to index
      %c0_49 = arith.constant 0 : index
      %78 = vector.load %arg16[%77, %c0_49] : memref<16x64xf32, #tpu.memory_space<vmem>>, vector<1x32xf32>
      %79 = arith.index_cast %76 : i32 to index
      %c32 = arith.constant 32 : index
      %80 = vector.load %arg16[%79, %c32] : memref<16x64xf32, #tpu.memory_space<vmem>>, vector<1x32xf32>
      %81 = arith.addf %78, %80 : vector<1x32xf32>
      %82 = arith.index_cast %arg20 : i32 to index
      %c0_50 = arith.constant 0 : index
      %83 = vector.load %arg17[%82, %c0_50] : memref<32x32xf32, #tpu.memory_space<vmem>>, vector<1x32xf32>
      tpu.vector_store %arg17[%82, %c0_50], %81 {strides = array<i32>} : memref<32x32xf32, #tpu.memory_space<vmem>>, vector<1x32xf32>,
    }
    %c32_i32_7 = arith.constant 32 : i32
    %c0_8 = arith.constant 0 : index
    %c0_9 = arith.constant 0 : index
    %10 = vector.load %arg17[%c0_8, %c0_9] : memref<32x32xf32, #tpu.memory_space<vmem>>, vector<32x32xf32>
    %c0_10 = arith.constant 0 : index
    %c0_11 = arith.constant 0 : index
    %11 = vector.load %arg15[%c0_10, %c0_11] : memref<32x32xf32, #tpu.memory_space<vmem>>, vector<32x32xf32>
    %12 = arith.addf %10, %11 : vector<32x32xf32>
    %c0_12 = arith.constant 0 : index
    %c0_13 = arith.constant 0 : index
    %13 = vector.load %arg8[%c0_12, %c0_13] : memref<1x32xf32, #tpu.memory_space<vmem>>, vector<1x32xf32>
    %c0_14 = arith.constant 0 : index
    %c0_15 = arith.constant 0 : index
    %14 = vector.load %arg9[%c0_14, %c0_15] : memref<1x32xf32, #tpu.memory_space<vmem>>, vector<1x32xf32>
    %cst_16 = arith.constant dense<0.000000e+00> : vector<32xf32>
    %15 = vector.multi_reduction <add>, %12, %cst_16 [1] : vector<32x32xf32> to vector<32xf32>
    %16 = vector.shape_cast %15 : vector<32xf32> to vector<32x1xf32>
    %cst_17 = arith.constant 3.200000e+01 : f32
    %17 = vector.broadcast %cst_17 : f32 to vector<32x1xf32>
    %18 = arith.divf %16, %17 : vector<32x1xf32>
    %19 = vector.broadcast %18 : vector<32x1xf32> to vector<32x32xf32>
    %20 = arith.subf %12, %19 : vector<32x32xf32>
    %21 = arith.mulf %20, %20 : vector<32x32xf32>
    %cst_18 = arith.constant dense<0.000000e+00> : vector<32xf32>
    %22 = vector.multi_reduction <add>, %21, %cst_18 [1] : vector<32x32xf32> to vector<32xf32>
    %23 = vector.shape_cast %22 : vector<32xf32> to vector<32x1xf32>
    %cst_19 = arith.constant 3.200000e+01 : f32
    %24 = vector.broadcast %cst_19 : f32 to vector<32x1xf32>
    %25 = arith.divf %23, %24 : vector<32x1xf32>
    %cst_20 = arith.constant 9.99999974E-6 : f32
    %26 = vector.broadcast %cst_20 : f32 to vector<32x1xf32>
    %27 = arith.addf %25, %26 : vector<32x1xf32>
    %28 = math.rsqrt %27 : vector<32x1xf32>
    %29 = vector.broadcast %28 : vector<32x1xf32> to vector<32x32xf32>
    %30 = arith.mulf %20, %29 : vector<32x32xf32>
    %31 = vector.broadcast %13 : vector<1x32xf32> to vector<32x32xf32>
    %32 = arith.mulf %30, %31 : vector<32x32xf32>
    %33 = vector.broadcast %14 : vector<1x32xf32> to vector<32x32xf32>
    %34 = arith.addf %32, %33 : vector<32x32xf32>
    %cst_21 = arith.constant 0.000000e+00 : f32
    %35 = vector.broadcast %cst_21 : f32 to vector<32x32xf32>
    %36 = arith.maximumf %34, %35 : vector<32x32xf32>
    %c0_22 = arith.constant 0 : index
    %c0_23 = arith.constant 0 : index
    %37 = vector.load %arg10[%c0_22, %c0_23] : memref<32x32xf32, #tpu.memory_space<vmem>>, vector<32x32xf32>
    %38 = arith.truncf %36 : vector<32x32xf32> to vector<32x32xbf16>
    %39 = arith.truncf %37 : vector<32x32xf32> to vector<32x32xbf16>
    %cst_24 = arith.constant dense<0.000000e+00> : vector<32x32xf32>
    %40 = tpu.matmul %38, %39, %cst_24 {dimension_numbers = #tpu.dot_dimension_numbers<[1], [0], [0], [1], [0, 0, 1, 1], [], []>} : vector<32x32xbf16>, vector<32x32xbf16>, vector<32x32xf32> -> vector<32x32xf32>
    %c0_25 = arith.constant 0 : index
    %c0_26 = arith.constant 0 : index
    %41 = vector.load %arg11[%c0_25, %c0_26] : memref<1x32xf32, #tpu.memory_space<vmem>>, vector<1x32xf32>
    %42 = vector.broadcast %41 : vector<1x32xf32> to vector<32x32xf32>
    %43 = arith.addf %40, %42 : vector<32x32xf32>
    %c0_27 = arith.constant 0 : index
    %c0_28 = arith.constant 0 : index
    %44 = vector.load %arg18[%c0_27, %c0_28] : memref<32x32xf32, #tpu.memory_space<vmem>>, vector<32x32xf32>
    tpu.vector_store %arg18[%c0_27, %c0_28], %43 {strides = array<i32>} : memref<32x32xf32, #tpu.memory_space<vmem>>, vector<32x32xf32>,
    %cst_29 = arith.constant 0.000000e+00 : f32
    %45 = vector.broadcast %cst_29 : f32 to vector<16x32xf32>
    %c0_30 = arith.constant 0 : index
    %c0_31 = arith.constant 0 : index
    %46 = vector.load %arg19[%c0_30, %c0_31] : memref<16x32xf32, #tpu.memory_space<vmem>>, vector<16x32xf32>
    tpu.vector_store %arg19[%c0_30, %c0_31], %45 {strides = array<i32>} : memref<16x32xf32, #tpu.memory_space<vmem>>, vector<16x32xf32>,
    %c0_i32_32 = arith.constant 0 : i32
    %c32_i32_33 = arith.constant 32 : i32
    %47 = arith.addi %c0_i32_32, %c32_i32_33 : i32
    %c1_i32_34 = arith.constant 1 : i32
    scf.for %arg20 = %c0_i32_32 to %47 step %c1_i32_34  : i32 {
      %73 = arith.index_cast %arg20 : i32 to index
      %74 = memref.load %arg2[%73] : memref<32xi32, #tpu.memory_space<smem>>
      %75 = arith.index_cast %74 : i32 to index
      %c0_49 = arith.constant 0 : index
      %76 = vector.load %arg19[%75, %c0_49] : memref<16x32xf32, #tpu.memory_space<vmem>>, vector<1x32xf32>
      %77 = arith.index_cast %arg20 : i32 to index
      %c0_50 = arith.constant 0 : index
      %78 = vector.load %arg18[%77, %c0_50] : memref<32x32xf32, #tpu.memory_space<vmem>>, vector<1x32xf32>
      %79 = arith.addf %76, %78 : vector<1x32xf32>
      %80 = arith.index_cast %74 : i32 to index
      %c0_51 = arith.constant 0 : index
      %81 = vector.load %arg19[%80, %c0_51] : memref<16x32xf32, #tpu.memory_space<vmem>>, vector<1x32xf32>
      tpu.vector_store %arg19[%80, %c0_51], %79 {strides = array<i32>} : memref<16x32xf32, #tpu.memory_space<vmem>>, vector<1x32xf32>,
    }
    %c32_i32_35 = arith.constant 32 : i32
    %c0_36 = arith.constant 0 : index
    %c0_37 = arith.constant 0 : index
    %48 = vector.load %arg19[%c0_36, %c0_37] : memref<16x32xf32, #tpu.memory_space<vmem>>, vector<16x32xf32>
    %49 = arith.addf %3, %48 : vector<16x32xf32>
    %c0_38 = arith.constant 0 : index
    %c0_39 = arith.constant 0 : index
    %50 = vector.load %arg12[%c0_38, %c0_39] : memref<1x32xf32, #tpu.memory_space<vmem>>, vector<1x32xf32>
    %c0_40 = arith.constant 0 : index
    %c0_41 = arith.constant 0 : index
    %51 = vector.load %arg13[%c0_40, %c0_41] : memref<1x32xf32, #tpu.memory_space<vmem>>, vector<1x32xf32>
    %cst_42 = arith.constant dense<0.000000e+00> : vector<16xf32>
    %52 = vector.multi_reduction <add>, %49, %cst_42 [1] : vector<16x32xf32> to vector<16xf32>
    %53 = vector.shape_cast %52 : vector<16xf32> to vector<16x1xf32>
    %cst_43 = arith.constant 3.200000e+01 : f32
    %54 = vector.broadcast %cst_43 : f32 to vector<16x1xf32>
    %55 = arith.divf %53, %54 : vector<16x1xf32>
    %56 = vector.broadcast %55 : vector<16x1xf32> to vector<16x32xf32>
    %57 = arith.subf %49, %56 : vector<16x32xf32>
    %58 = arith.mulf %57, %57 : vector<16x32xf32>
    %cst_44 = arith.constant dense<0.000000e+00> : vector<16xf32>
    %59 = vector.multi_reduction <add>, %58, %cst_44 [1] : vector<16x32xf32> to vector<16xf32>
    %60 = vector.shape_cast %59 : vector<16xf32> to vector<16x1xf32>
    %cst_45 = arith.constant 3.200000e+01 : f32
    %61 = vector.broadcast %cst_45 : f32 to vector<16x1xf32>
    %62 = arith.divf %60, %61 : vector<16x1xf32>
    %cst_46 = arith.constant 9.99999974E-6 : f32
    %63 = vector.broadcast %cst_46 : f32 to vector<16x1xf32>
    %64 = arith.addf %62, %63 : vector<16x1xf32>
    %65 = math.rsqrt %64 : vector<16x1xf32>
    %66 = vector.broadcast %65 : vector<16x1xf32> to vector<16x32xf32>
    %67 = arith.mulf %57, %66 : vector<16x32xf32>
    %68 = vector.broadcast %50 : vector<1x32xf32> to vector<16x32xf32>
    %69 = arith.mulf %67, %68 : vector<16x32xf32>
    %70 = vector.broadcast %51 : vector<1x32xf32> to vector<16x32xf32>
    %71 = arith.addf %69, %70 : vector<16x32xf32>
    %c0_47 = arith.constant 0 : index
    %c0_48 = arith.constant 0 : index
    %72 = vector.load %arg14[%c0_47, %c0_48] : memref<16x32xf32, #tpu.memory_space<vmem>>, vector<16x32xf32>
    tpu.vector_store %arg14[%c0_47, %c0_48], %71 {strides = array<i32>} : memref<16x32xf32, #tpu.memory_space<vmem>>, vector<16x32xf32>,
    return
  }
  func.func @transform_0(%arg0: i32, %arg1: memref<32xi32, #tpu.memory_space<smem>>, %arg2: memref<32xi32, #tpu.memory_space<smem>>) -> (i32, i32) {
    %c0_i32 = arith.constant 0 : i32
    %c0_i32_0 = arith.constant 0 : i32
    %c0_i32_1 = arith.constant 0 : i32
    return %c0_i32, %c0_i32_0 : i32, i32
  }
  func.func @transform_1(%arg0: i32, %arg1: memref<32xi32, #tpu.memory_space<smem>>, %arg2: memref<32xi32, #tpu.memory_space<smem>>) -> (i32, i32) {
    %c0_i32 = arith.constant 0 : i32
    %c0_i32_0 = arith.constant 0 : i32
    %c0_i32_1 = arith.constant 0 : i32
    return %c0_i32, %c0_i32_0 : i32, i32
  }
  func.func @transform_2(%arg0: i32, %arg1: memref<32xi32, #tpu.memory_space<smem>>, %arg2: memref<32xi32, #tpu.memory_space<smem>>) -> (i32, i32) {
    %c0_i32 = arith.constant 0 : i32
    %c0_i32_0 = arith.constant 0 : i32
    %c0_i32_1 = arith.constant 0 : i32
    return %c0_i32, %c0_i32_0 : i32, i32
  }
  func.func @transform_3(%arg0: i32, %arg1: memref<32xi32, #tpu.memory_space<smem>>, %arg2: memref<32xi32, #tpu.memory_space<smem>>) -> (i32, i32) {
    %c0_i32 = arith.constant 0 : i32
    %c0_i32_0 = arith.constant 0 : i32
    %c0_i32_1 = arith.constant 0 : i32
    return %c0_i32, %c0_i32_0 : i32, i32
  }
  func.func @transform_4(%arg0: i32, %arg1: memref<32xi32, #tpu.memory_space<smem>>, %arg2: memref<32xi32, #tpu.memory_space<smem>>) -> (i32, i32) {
    %c0_i32 = arith.constant 0 : i32
    %c0_i32_0 = arith.constant 0 : i32
    %c0_i32_1 = arith.constant 0 : i32
    return %c0_i32, %c0_i32_0 : i32, i32
  }
  func.func @transform_5(%arg0: i32, %arg1: memref<32xi32, #tpu.memory_space<smem>>, %arg2: memref<32xi32, #tpu.memory_space<smem>>) -> (i32, i32) {
    %c0_i32 = arith.constant 0 : i32
    %c0_i32_0 = arith.constant 0 : i32
    %c0_i32_1 = arith.constant 0 : i32
    return %c0_i32, %c0_i32_0 : i32, i32
  }
  func.func @transform_6(%arg0: i32, %arg1: memref<32xi32, #tpu.memory_space<smem>>, %arg2: memref<32xi32, #tpu.memory_space<smem>>) -> (i32, i32) {
    %c0_i32 = arith.constant 0 : i32
    %c0_i32_0 = arith.constant 0 : i32
    %c0_i32_1 = arith.constant 0 : i32
    return %c0_i32, %c0_i32_0 : i32, i32
  }
  func.func @transform_7(%arg0: i32, %arg1: memref<32xi32, #tpu.memory_space<smem>>, %arg2: memref<32xi32, #tpu.memory_space<smem>>) -> (i32, i32) {
    %c0_i32 = arith.constant 0 : i32
    %c0_i32_0 = arith.constant 0 : i32
    %c0_i32_1 = arith.constant 0 : i32
    return %c0_i32, %c0_i32_0 : i32, i32
  }
  func.func @transform_8(%arg0: i32, %arg1: memref<32xi32, #tpu.memory_space<smem>>, %arg2: memref<32xi32, #tpu.memory_space<smem>>) -> (i32, i32) {
    %c0_i32 = arith.constant 0 : i32
    %c0_i32_0 = arith.constant 0 : i32
    %c0_i32_1 = arith.constant 0 : i32
    return %c0_i32, %c0_i32_0 : i32, i32
  }
  func.func @transform_9(%arg0: i32, %arg1: memref<32xi32, #tpu.memory_space<smem>>, %arg2: memref<32xi32, #tpu.memory_space<smem>>) -> (i32, i32) {
    %c0_i32 = arith.constant 0 : i32
    %c0_i32_0 = arith.constant 0 : i32
    %c0_i32_1 = arith.constant 0 : i32
    return %c0_i32, %c0_i32_0 : i32, i32
  }
  func.func @transform_10(%arg0: i32, %arg1: memref<32xi32, #tpu.memory_space<smem>>, %arg2: memref<32xi32, #tpu.memory_space<smem>>) -> (i32, i32) {
    %c0_i32 = arith.constant 0 : i32
    %c0_i32_0 = arith.constant 0 : i32
    %c0_i32_1 = arith.constant 0 : i32
    return %c0_i32, %c0_i32_0 : i32, i32
  }
  func.func @transform_11(%arg0: i32, %arg1: memref<32xi32, #tpu.memory_space<smem>>, %arg2: memref<32xi32, #tpu.memory_space<smem>>) -> (i32, i32) {
    %c0_i32 = arith.constant 0 : i32
    %c0_i32_0 = arith.constant 0 : i32
    %c0_i32_1 = arith.constant 0 : i32
    return %c0_i32, %c0_i32_0 : i32, i32
  }
}

</mosaic_0001>

<llo_original>
// kernel: tpu_custom_call.1
$region0: #{tpu_custom_call.1}
  #allocation0 [shape = 'u32[]', space=smem, size = 0x4, offset = 0x4, fixed_abs, tag = 'smem constant byte address 0x4 - core index']
  #allocation1 [shape = 'u32[144,128]{1,0:T(1,128)}', space=vmem, size = 0x12000, scoped, tag = 'internal scratch']
  #allocation2 [shape = 'f32[32,32]{1,0:T(8,128)}', space=vmem, size = 0x4000, scoped, tag = 'scratch operand']
  #allocation3 [shape = 'f32[16,64]{1,0:T(8,128)}', space=vmem, size = 0x2000, scoped, tag = 'scratch operand']
  #allocation4 [shape = 'f32[32,32]{1,0:T(8,128)}', space=vmem, size = 0x4000, scoped, tag = 'scratch operand']
  #allocation5 [shape = 'f32[32,32]{1,0:T(8,128)}', space=vmem, size = 0x4000, scoped, tag = 'scratch operand']
  #allocation6 [shape = 'f32[16,32]{1,0:T(8,128)}', space=vmem, size = 0x2000, scoped, tag = 'scratch operand']
  #allocation7 [shape = 's32[1]{0}', space=sflag, size = 0x4, scoped, tag = 'scoped memory for tpu_custom_call.1']
  #allocation8 [shape = 'u8[512]{0}', space=smem, size = 0x200, scoped, tag = 'prefetched SMEM operand 0']
  #allocation9 [shape = 'u8[512]{0}', space=smem, size = 0x200, scoped, tag = 'prefetched SMEM operand 1']
  %s0 = inlined_call_operand.hbm [shape: s32[32], index: 0, kind: input, shape index: {}]
  %s1 = inlined_call_operand.vmem [shape: s32[32], index: 1, kind: input, shape index: {}]
  %s2 = inlined_call_operand.hbm [shape: f32[16,32], index: 2, kind: input, shape index: {}]
  %s3 = inlined_call_operand.hbm [shape: f32[32,32], index: 3, kind: input, shape index: {}]
  %s4 = inlined_call_operand.hbm [shape: f32[32,64], index: 4, kind: input, shape index: {}]
  %s5 = inlined_call_operand.hbm [shape: f32[32,32], index: 5, kind: input, shape index: {}]
  %s6 = inlined_call_operand.vmem [shape: f32[1,32], index: 6, kind: input, shape index: {}]
  %s7 = inlined_call_operand.vmem [shape: f32[1,32], index: 7, kind: input, shape index: {}]
  %s8 = inlined_call_operand.vmem [shape: f32[1,32], index: 8, kind: input, shape index: {}]
  %s9 = inlined_call_operand.hbm [shape: f32[32,32], index: 9, kind: input, shape index: {}]
  %s10 = inlined_call_operand.vmem [shape: f32[1,32], index: 10, kind: input, shape index: {}]
  %s11 = inlined_call_operand.vmem [shape: f32[1,32], index: 11, kind: input, shape index: {}]
  %s12 = inlined_call_operand.vmem [shape: f32[1,32], index: 12, kind: input, shape index: {}]
  %s13 = inlined_call_operand.hbm [shape: f32[16,32], index: 13, kind: output, shape index: {}]
  %s14 = sld [smem:[#allocation0]]
  $region115: #{tpu_custom_call.1} parent=0
    _
  %s16 = ssub.s32 1, %s14
  %s17 = scalar_select 0, %s16, %s14
  %19 = dma.hbm_to_smem %s0, 16, [#allocation8], [#allocation7]
  %s20 = sshll.u32 %s1, 4
  %s21 = int_to_ptr.vmem [resolvable:$true] %s20
  %23 = dma.vmem_to_smem %s21, 16, [#allocation9], [#allocation7]
  %24 = dma.done [#allocation7], 32
  %25 = sfence
  $region1: #{tpu_custom_call.1} parent=0
    #allocation10 [shape = 'u8[8192]{0}', space=vmem, size = 0x2000, scoped, tag = 'input window, operand 2, single buffered']
    #allocation11 [shape = 's32[2]{0}', space=sflag, size = 0x8, scoped, tag = 'scoped memory for tpu_custom_call.1']
    #allocation12 [shape = 's32[2]{0}', space=sflag, size = 0x8, scoped, tag = 'scoped memory for tpu_custom_call.1']
    #allocation13 [shape = 'u8[16384]{0}', space=vmem, size = 0x4000, scoped, tag = 'input window, operand 3, single buffered']
    #allocation14 [shape = 's32[1]{0}', space=sflag, size = 0x4, scoped, tag = 'scoped memory for tpu_custom_call.1']
    #allocation15 [shape = 'u8[16384]{0}', space=vmem, size = 0x4000, scoped, tag = 'input window, operand 4, single buffered']
    #allocation16 [shape = 'u8[16384]{0}', space=vmem, size = 0x4000, scoped, tag = 'input window, operand 5, single buffered']
    #allocation17 [shape = 's32[1]{0}', space=sflag, size = 0x4, scoped, tag = 'scoped memory for tpu_custom_call.1']
    #allocation18 [shape = 'u8[16384]{0}', space=vmem, size = 0x4000, scoped, tag = 'input window, operand 9, single buffered']
    #allocation19 [shape = 'u8[8192]{0}', space=vmem, size = 0x2000, scoped, tag = 'output window, operand 0, single buffered']
    %26 = vsyncpa [#allocation11], 0
    %27 = vsyncpa [#allocation14], 0
    %28 = vsyncpa [#allocation17], 0
    %29 = vsyncpa [#allocation12], 0
    loop: start=0, step=1, limit=6
    $region2: #{tpu_custom_call.1} parent=1 // loop_pre_header
      _
    $region3: #{tpu_custom_call.1} parent=1 // loop_header
      %s31 = sphi 0, %s35
      %p32 = scmp.ge.s32.totalorder %s31, 6
      %s39 = sphi 0, %s39
      %s41 = sphi 0, %s39
      %s42 = sphi 0, %s41
      %s56 = sphi 0, %s42
      %s60 = sphi 0, %s60
      %s62 = sphi 0, %s60
      %s63 = sphi 0, %s62
      %s77 = sphi 0, %s63
      %s81 = sphi 0, %s81
      %s83 = sphi 0, %s81
      %s84 = sphi 0, %s83
      %s98 = sphi 0, %s84
      %s102 = sphi 0, %s102
      %s104 = sphi 0, %s102
      %s105 = sphi 0, %s104
      %s119 = sphi 0, %s105
      %s123 = sphi 0, %s123
      %s125 = sphi 0, %s123
      %s126 = sphi 0, %s125
      %s140 = sphi 0, %s126
      %s144 = sphi 0, %s144
      %s146 = sphi 0, %s144
      %s147 = sphi 0, %s146
      %s161 = sphi 0, %s147
      %s165 = sphi 0, %s165
      %s167 = sphi 0, %s165
      %s168 = sphi 0, %s167
      %s182 = sphi 0, %s168
      %s186 = sphi 0, %s186
      %s188 = sphi 0, %s186
      %s189 = sphi 0, %s188
      %s203 = sphi 0, %s189
      %s207 = sphi 0, %s207
      %s209 = sphi 0, %s207
      %s210 = sphi 0, %s209
      %s224 = sphi 0, %s210
      %s228 = sphi 0, %s228
      %s230 = sphi 0, %s228
      %s231 = sphi 0, %s230
      %s245 = sphi 0, %s231
      %s249 = sphi 0, %s249
      %s251 = sphi 0, %s249
      %s252 = sphi 0, %s251
      %s266 = sphi 0, %s252
      %s270 = sphi 0, %s270
      %s272 = sphi 0, %s270
      %s273 = sphi 0, %s272
      %s287 = sphi 0, %s273
    $region4: #{tpu_custom_call.1} parent=1 // loop_header_branch
      %34 = sbr.rel (%p32) target = $region8
    $region5: #{tpu_custom_call.1} parent=1 // loop_body
      %s36 = ssub.s32 %s31, 1
      %s37 = ssub.s32 %s31, 2
      %s38 = sadd.s32 %s31, 1
      %s40 = sadd.s32 %s39, 1
      %p43 = scmp.eq.s32.totalorder %s31, 3
      %p44 = scmp.ne.s32.totalorder %s39, %s41
      %p45 = scmp.eq.s32.totalorder %s31, 0
      %p46 = por %p44, %p45
      %p47 = scmp.ne.s32.totalorder %s39, %s41
      %p48 = scmp.eq.s32.totalorder %s36, 3
      %p49 = por %p47, %p48
      %p50 = scmp.ne.s32.totalorder %s41, %s42
      %p51 = scmp.eq.s32.totalorder %s36, 0
      %p52 = por %p50, %p51
      %p53 = scmp.ne.s32.totalorder %s41, %s42
      %p54 = scmp.eq.s32.totalorder %s37, 3
      %p55 = por %p53, %p54
      %p57 = scmp.ne.s32.totalorder %s42, %s56
      %p58 = scmp.eq.s32.totalorder %s37, 0
      %p59 = por %p57, %p58
      %s61 = sadd.s32 %s60, 1
      %p64 = scmp.eq.s32.totalorder %s31, 3
      %p65 = scmp.ne.s32.totalorder %s60, %s62
      %p66 = scmp.eq.s32.totalorder %s31, 0
      %p67 = por %p65, %p66
      %p68 = scmp.ne.s32.totalorder %s60, %s62
      %p69 = scmp.eq.s32.totalorder %s36, 3
      %p70 = por %p68, %p69
      %p71 = scmp.ne.s32.totalorder %s62, %s63
      %p72 = scmp.eq.s32.totalorder %s36, 0
      %p73 = por %p71, %p72
      %p74 = scmp.ne.s32.totalorder %s62, %s63
      %p75 = scmp.eq.s32.totalorder %s37, 3
      %p76 = por %p74, %p75
      %p78 = scmp.ne.s32.totalorder %s63, %s77
      %p79 = scmp.eq.s32.totalorder %s37, 0
      %p80 = por %p78, %p79
      %s82 = sadd.s32 %s81, 1
      %p85 = scmp.eq.s32.totalorder %s31, 3
      %p86 = scmp.ne.s32.totalorder %s81, %s83
      %p87 = scmp.eq.s32.totalorder %s31, 0
      %p88 = por %p86, %p87
      %p89 = scmp.ne.s32.totalorder %s81, %s83
      %p90 = scmp.eq.s32.totalorder %s36, 3
      %p91 = por %p89, %p90
      %p92 = scmp.ne.s32.totalorder %s83, %s84
      %p93 = scmp.eq.s32.totalorder %s36, 0
      %p94 = por %p92, %p93
      %p95 = scmp.ne.s32.totalorder %s83, %s84
      %p96 = scmp.eq.s32.totalorder %s37, 3
      %p97 = por %p95, %p96
      %p99 = scmp.ne.s32.totalorder %s84, %s98
      %p100 = scmp.eq.s32.totalorder %s37, 0
      %p101 = por %p99, %p100
      %s103 = sadd.s32 %s102, 1
      %p106 = scmp.eq.s32.totalorder %s31, 3
      %p107 = scmp.ne.s32.totalorder %s102, %s104
      %p108 = scmp.eq.s32.totalorder %s31, 0
      %p109 = por %p107, %p108
      %p110 = scmp.ne.s32.totalorder %s102, %s104
      %p111 = scmp.eq.s32.totalorder %s36, 3
      %p112 = por %p110, %p111
      %p113 = scmp.ne.s32.totalorder %s104, %s105
      %p114 = scmp.eq.s32.totalorder %s36, 0
      %p115 = por %p113, %p114
      %p116 = scmp.ne.s32.totalorder %s104, %s105
      %p117 = scmp.eq.s32.totalorder %s37, 3
      %p118 = por %p116, %p117
      %p120 = scmp.ne.s32.totalorder %s105, %s119
      %p121 = scmp.eq.s32.totalorder %s37, 0
      %p122 = por %p120, %p121
      %s124 = sadd.s32 %s123, 1
      %p127 = scmp.eq.s32.totalorder %s31, 3
      %p128 = scmp.ne.s32.totalorder %s123, %s125
      %p129 = scmp.eq.s32.totalorder %s31, 0
      %p130 = por %p128, %p129
      %p131 = scmp.ne.s32.totalorder %s123, %s125
      %p132 = scmp.eq.s32.totalorder %s36, 3
      %p133 = por %p131, %p132
      %p134 = scmp.ne.s32.totalorder %s125, %s126
      %p135 = scmp.eq.s32.totalorder %s36, 0
      %p136 = por %p134, %p135
      %p137 = scmp.ne.s32.totalorder %s125, %s126
      %p138 = scmp.eq.s32.totalorder %s37, 3
      %p139 = por %p137, %p138
      %p141 = scmp.ne.s32.totalorder %s126, %s140
      %p142 = scmp.eq.s32.totalorder %s37, 0
      %p143 = por %p141, %p142
      %s145 = sadd.s32 %s144, 1
      %p148 = scmp.eq.s32.totalorder %s31, 3
      %p149 = scmp.ne.s32.totalorder %s144, %s146
      %p150 = scmp.eq.s32.totalorder %s31, 0
      %p151 = por %p149, %p150
      %p152 = scmp.ne.s32.totalorder %s144, %s146
      %p153 = scmp.eq.s32.totalorder %s36, 3
      %p154 = por %p152, %p153
      %p155 = scmp.ne.s32.totalorder %s146, %s147
      %p156 = scmp.eq.s32.totalorder %s36, 0
      %p157 = por %p155, %p156
      %p158 = scmp.ne.s32.totalorder %s146, %s147
      %p159 = scmp.eq.s32.totalorder %s37, 3
      %p160 = por %p158, %p159
      %p162 = scmp.ne.s32.totalorder %s147, %s161
      %p163 = scmp.eq.s32.totalorder %s37, 0
      %p164 = por %p162, %p163
      %s166 = sadd.s32 %s165, 1
      %p169 = scmp.eq.s32.totalorder %s31, 3
      %p170 = scmp.ne.s32.totalorder %s165, %s167
      %p171 = scmp.eq.s32.totalorder %s31, 0
      %p172 = por %p170, %p171
      %p173 = scmp.ne.s32.totalorder %s165, %s167
      %p174 = scmp.eq.s32.totalorder %s36, 3
      %p175 = por %p173, %p174
      %p176 = scmp.ne.s32.totalorder %s167, %s168
      %p177 = scmp.eq.s32.totalorder %s36, 0
      %p178 = por %p176, %p177
      %p179 = scmp.ne.s32.totalorder %s167, %s168
      %p180 = scmp.eq.s32.totalorder %s37, 3
      %p181 = por %p179, %p180
      %p183 = scmp.ne.s32.totalorder %s168, %s182
      %p184 = scmp.eq.s32.totalorder %s37, 0
      %p185 = por %p183, %p184
      %s187 = sadd.s32 %s186, 1
      %p190 = scmp.eq.s32.totalorder %s31, 3
      %p191 = scmp.ne.s32.totalorder %s186, %s188
      %p192 = scmp.eq.s32.totalorder %s31, 0
      %p193 = por %p191, %p192
      %p194 = scmp.ne.s32.totalorder %s186, %s188
      %p195 = scmp.eq.s32.totalorder %s36, 3
      %p196 = por %p194, %p195
      %p197 = scmp.ne.s32.totalorder %s188, %s189
      %p198 = scmp.eq.s32.totalorder %s36, 0
      %p199 = por %p197, %p198
      %p200 = scmp.ne.s32.totalorder %s188, %s189
      %p201 = scmp.eq.s32.totalorder %s37, 3
      %p202 = por %p200, %p201
      %p204 = scmp.ne.s32.totalorder %s189, %s203
      %p205 = scmp.eq.s32.totalorder %s37, 0
      %p206 = por %p204, %p205
      %s208 = sadd.s32 %s207, 1
      %p211 = scmp.eq.s32.totalorder %s31, 3
      %p212 = scmp.ne.s32.totalorder %s207, %s209
      %p213 = scmp.eq.s32.totalorder %s31, 0
      %p214 = por %p212, %p213
      %p215 = scmp.ne.s32.totalorder %s207, %s209
      %p216 = scmp.eq.s32.totalorder %s36, 3
      %p217 = por %p215, %p216
      %p218 = scmp.ne.s32.totalorder %s209, %s210
      %p219 = scmp.eq.s32.totalorder %s36, 0
      %p220 = por %p218, %p219
      %p221 = scmp.ne.s32.totalorder %s209, %s210
      %p222 = scmp.eq.s32.totalorder %s37, 3
      %p223 = por %p221, %p222
      %p225 = scmp.ne.s32.totalorder %s210, %s224
      %p226 = scmp.eq.s32.totalorder %s37, 0
      %p227 = por %p225, %p226
      %s229 = sadd.s32 %s228, 1
      %p232 = scmp.eq.s32.totalorder %s31, 3
      %p233 = scmp.ne.s32.totalorder %s228, %s230
      %p234 = scmp.eq.s32.totalorder %s31, 0
      %p235 = por %p233, %p234
      %p236 = scmp.ne.s32.totalorder %s228, %s230
      %p237 = scmp.eq.s32.totalorder %s36, 3
      %p238 = por %p236, %p237
      %p239 = scmp.ne.s32.totalorder %s230, %s231
      %p240 = scmp.eq.s32.totalorder %s36, 0
      %p241 = por %p239, %p240
      %p242 = scmp.ne.s32.totalorder %s230, %s231
      %p243 = scmp.eq.s32.totalorder %s37, 3
      %p244 = por %p242, %p243
      %p246 = scmp.ne.s32.totalorder %s231, %s245
      %p247 = scmp.eq.s32.totalorder %s37, 0
      %p248 = por %p246, %p247
      %s250 = sadd.s32 %s249, 1
      %p253 = scmp.eq.s32.totalorder %s31, 3
      %p254 = scmp.ne.s32.totalorder %s249, %s251
      %p255 = scmp.eq.s32.totalorder %s31, 0
      %p256 = por %p254, %p255
      %p257 = scmp.ne.s32.totalorder %s249, %s251
      %p258 = scmp.eq.s32.totalorder %s36, 3
      %p259 = por %p257, %p258
      %p260 = scmp.ne.s32.totalorder %s251, %s252
      %p261 = scmp.eq.s32.totalorder %s36, 0
      %p262 = por %p260, %p261
      %p263 = scmp.ne.s32.totalorder %s251, %s252
      %p264 = scmp.eq.s32.totalorder %s37, 3
      %p265 = por %p263, %p264
      %p267 = scmp.ne.s32.totalorder %s252, %s266
      %p268 = scmp.eq.s32.totalorder %s37, 0
      %p269 = por %p267, %p268
      %s271 = sadd.s32 %s270, 1
      %p274 = scmp.eq.s32.totalorder %s31, 3
      %p275 = scmp.ne.s32.totalorder %s270, %s272
      %p276 = scmp.eq.s32.totalorder %s31, 0
      %p277 = por %p275, %p276
      %p278 = scmp.ne.s32.totalorder %s270, %s272
      %p279 = scmp.eq.s32.totalorder %s36, 3
      %p280 = por %p278, %p279
      %p281 = scmp.ne.s32.totalorder %s272, %s273
      %p282 = scmp.eq.s32.totalorder %s36, 0
      %p283 = por %p281, %p282
      %p284 = scmp.ne.s32.totalorder %s272, %s273
      %p285 = scmp.eq.s32.totalorder %s37, 3
      %p286 = por %p284, %p285
      %p288 = scmp.ne.s32.totalorder %s273, %s287
      %p289 = scmp.eq.s32.totalorder %s37, 0
      %p290 = por %p288, %p289
      %p291 = scmp.le.s32.totalorder 1, %s31
      %p292 = scmp.lt.s32.totalorder %s31, 5
      %p293 = pnand %p291, %p292
      %p294 = pneg %p293
      // Predicated region
      $region9: #{tpu_custom_call.1} parent=5 // pred_check
        _
      $region10: #{tpu_custom_call.1} parent=5 // pred_check_branch
        %296 = sbr.rel (%p293) target = $region12
      $region11: #{tpu_custom_call.1} parent=5 // pred_region
        %s297 = ssub.s32 %s31, 1
        // Predicated region
        $region13: #{tpu_custom_call.1} parent=11 // pred_check
          %p298 = pneg %p52
        $region14: #{tpu_custom_call.1} parent=11 // pred_check_branch
          %300 = sbr.rel (%p298) target = $region16
        $region15: #{tpu_custom_call.1} parent=11 // pred_region
          %s302 = ssub.s32 256, 256
          %303 = vsyncadd [#allocation11], %s302
          %s304 = sshll.u32 [#allocation10], 4
          %s305 = int_to_ptr.vmem [resolvable:$true] %s304
          %310 = dma.hbm_to_vmem [thread:$0]  %s2, 256, %s305, [#allocation11], 128, 128, 8
        $region16: #{tpu_custom_call.1} parent=11 // pred_fallthru
          _
        // Predicated region
        $region17: #{tpu_custom_call.1} parent=11 // pred_check
          %p311 = pneg %p73
        $region18: #{tpu_custom_call.1} parent=11 // pred_check_branch
          %313 = sbr.rel (%p311) target = $region20
        $region19: #{tpu_custom_call.1} parent=11 // pred_region
          %s315 = ssub.s32 512, 512
          %316 = vsyncadd [#allocation14], %s315
          %s317 = sshll.u32 [#allocation13], 4
          %s318 = int_to_ptr.vmem [resolvable:$true] %s317
          %323 = dma.hbm_to_vmem [thread:$0]  %s3, 512, %s318, [#allocation14], 128, 128, 8
        $region20: #{tpu_custom_call.1} parent=11 // pred_fallthru
          _
        // Predicated region
        $region21: #{tpu_custom_call.1} parent=11 // pred_check
          %p324 = pneg %p94
        $region22: #{tpu_custom_call.1} parent=11 // pred_check_branch
          %326 = sbr.rel (%p324) target = $region24
        $region23: #{tpu_custom_call.1} parent=11 // pred_region
          %s328 = ssub.s32 512, 512
          %329 = vsyncadd [#allocation14], %s328
          %s330 = sshll.u32 [#allocation15], 4
          %s331 = int_to_ptr.vmem [resolvable:$true] %s330
          %336 = dma.hbm_to_vmem [thread:$0]  %s4, 512, %s331, [#allocation14], 128, 128, 8
        $region24: #{tpu_custom_call.1} parent=11 // pred_fallthru
          _
        // Predicated region
        $region25: #{tpu_custom_call.1} parent=11 // pred_check
          %p337 = pneg %p115
        $region26: #{tpu_custom_call.1} parent=11 // pred_check_branch
          %339 = sbr.rel (%p337) target = $region28
        $region27: #{tpu_custom_call.1} parent=11 // pred_region
          %s341 = ssub.s32 512, 512
          %342 = vsyncadd [#allocation17], %s341
          %s343 = sshll.u32 [#allocation16], 4
          %s344 = int_to_ptr.vmem [resolvable:$true] %s343
          %349 = dma.hbm_to_vmem [thread:$0]  %s5, 512, %s344, [#allocation17], 128, 128, 8
        $region28: #{tpu_custom_call.1} parent=11 // pred_fallthru
          _
        // Predicated region
        $region29: #{tpu_custom_call.1} parent=11 // pred_check
          %p350 = pneg %p136
        $region30: #{tpu_custom_call.1} parent=11 // pred_check_branch
          %352 = sbr.rel (%p350) target = $region32
        $region31: #{tpu_custom_call.1} parent=11 // pred_region
          _
        $region32: #{tpu_custom_call.1} parent=11 // pred_fallthru
          _
        // Predicated region
        $region33: #{tpu_custom_call.1} parent=11 // pred_check
          %p353 = pneg %p157
        $region34: #{tpu_custom_call.1} parent=11 // pred_check_branch
          %355 = sbr.rel (%p353) target = $region36
        $region35: #{tpu_custom_call.1} parent=11 // pred_region
          _
        $region36: #{tpu_custom_call.1} parent=11 // pred_fallthru
          _
        // Predicated region
        $region37: #{tpu_custom_call.1} parent=11 // pred_check
          %p356 = pneg %p178
        $region38: #{tpu_custom_call.1} parent=11 // pred_check_branch
          %358 = sbr.rel (%p356) target = $region40
        $region39: #{tpu_custom_call.1} parent=11 // pred_region
          _
        $region40: #{tpu_custom_call.1} parent=11 // pred_fallthru
          _
        // Predicated region
        $region41: #{tpu_custom_call.1} parent=11 // pred_check
          %p359 = pneg %p199
        $region42: #{tpu_custom_call.1} parent=11 // pred_check_branch
          %361 = sbr.rel (%p359) target = $region44
        $region43: #{tpu_custom_call.1} parent=11 // pred_region
          %s363 = ssub.s32 512, 512
          %364 = vsyncadd [#allocation17], %s363
          %s365 = sshll.u32 [#allocation18], 4
          %s366 = int_to_ptr.vmem [resolvable:$true] %s365
          %371 = dma.hbm_to_vmem [thread:$0]  %s9, 512, %s366, [#allocation17], 128, 128, 8
        $region44: #{tpu_custom_call.1} parent=11 // pred_fallthru
          _
        // Predicated region
        $region45: #{tpu_custom_call.1} parent=11 // pred_check
          %p372 = pneg %p220
        $region46: #{tpu_custom_call.1} parent=11 // pred_check_branch
          %374 = sbr.rel (%p372) target = $region48
        $region47: #{tpu_custom_call.1} parent=11 // pred_region
          _
        $region48: #{tpu_custom_call.1} parent=11 // pred_fallthru
          _
        // Predicated region
        $region49: #{tpu_custom_call.1} parent=11 // pred_check
          %p375 = pneg %p241
        $region50: #{tpu_custom_call.1} parent=11 // pred_check_branch
          %377 = sbr.rel (%p375) target = $region52
        $region51: #{tpu_custom_call.1} parent=11 // pred_region
          _
        $region52: #{tpu_custom_call.1} parent=11 // pred_fallthru
          _
        // Predicated region
        $region53: #{tpu_custom_call.1} parent=11 // pred_check
          %p378 = pneg %p262
        $region54: #{tpu_custom_call.1} parent=11 // pred_check_branch
          %380 = sbr.rel (%p378) target = $region56
        $region55: #{tpu_custom_call.1} parent=11 // pred_region
          _
        $region56: #{tpu_custom_call.1} parent=11 // pred_fallthru
          _
      $region12: #{tpu_custom_call.1} parent=5 // pred_fallthru
        _
      %p381 = scmp.lt.s32.totalorder %s31, 4
      // Predicated region
      $region57: #{tpu_custom_call.1} parent=5 // pred_check
        %p382 = pneg %p381
      $region58: #{tpu_custom_call.1} parent=5 // pred_check_branch
        %384 = sbr.rel (%p382) target = $region60
      $region59: #{tpu_custom_call.1} parent=5 // pred_region
        _
      $region60: #{tpu_custom_call.1} parent=5 // pred_fallthru
        _
      %p385 = scmp.le.s32.totalorder 1, %s31
      %p386 = scmp.lt.s32.totalorder %s31, 5
      %p387 = pnand %p385, %p386
      %p388 = pneg %p387
      // Predicated region
      $region61: #{tpu_custom_call.1} parent=5 // pred_check
        _
      $region62: #{tpu_custom_call.1} parent=5 // pred_check_branch
        %390 = sbr.rel (%p387) target = $region64
      $region63: #{tpu_custom_call.1} parent=5 // pred_region
        %s391 = ssub.s32 %s31, 1
        // Predicated region
        $region65: #{tpu_custom_call.1} parent=63 // pred_check
          %p392 = pneg %p52
        $region66: #{tpu_custom_call.1} parent=63 // pred_check_branch
          %394 = sbr.rel (%p392) target = $region68
        $region67: #{tpu_custom_call.1} parent=63 // pred_region
          %395 = dma.done [#allocation11], 256
        $region68: #{tpu_custom_call.1} parent=63 // pred_fallthru
          _
        // Predicated region
        $region69: #{tpu_custom_call.1} parent=63 // pred_check
          %p396 = pneg %p73
        $region70: #{tpu_custom_call.1} parent=63 // pred_check_branch
          %398 = sbr.rel (%p396) target = $region72
        $region71: #{tpu_custom_call.1} parent=63 // pred_region
          %399 = dma.done [#allocation14], 512
        $region72: #{tpu_custom_call.1} parent=63 // pred_fallthru
          _
        // Predicated region
        $region73: #{tpu_custom_call.1} parent=63 // pred_check
          %p400 = pneg %p94
        $region74: #{tpu_custom_call.1} parent=63 // pred_check_branch
          %402 = sbr.rel (%p400) target = $region76
        $region75: #{tpu_custom_call.1} parent=63 // pred_region
          %403 = dma.done [#allocation14], 512
        $region76: #{tpu_custom_call.1} parent=63 // pred_fallthru
          _
        // Predicated region
        $region77: #{tpu_custom_call.1} parent=63 // pred_check
          %p404 = pneg %p115
        $region78: #{tpu_custom_call.1} parent=63 // pred_check_branch
          %406 = sbr.rel (%p404) target = $region80
        $region79: #{tpu_custom_call.1} parent=63 // pred_region
          %407 = dma.done [#allocation17], 512
        $region80: #{tpu_custom_call.1} parent=63 // pred_fallthru
          _
        // Predicated region
        $region81: #{tpu_custom_call.1} parent=63 // pred_check
          %p408 = pneg %p199
        $region82: #{tpu_custom_call.1} parent=63 // pred_check_branch
          %410 = sbr.rel (%p408) target = $region84
        $region83: #{tpu_custom_call.1} parent=63 // pred_region
          %411 = dma.done [#allocation17], 512
        $region84: #{tpu_custom_call.1} parent=63 // pred_fallthru
          _
        %p412 = pneg %p52
        %p413 = pneg %p49
        %p414 = pneg %p73
        %p415 = pneg %p70
        %p416 = pneg %p94
        %p417 = pneg %p91
        %p418 = pneg %p115
        %p419 = pneg %p112
        %p420 = pneg %p136
        %p421 = pneg %p133
        %p422 = pneg %p157
        %p423 = pneg %p154
        %p424 = pneg %p178
        %p425 = pneg %p175
        %p426 = pneg %p199
        %p427 = pneg %p196
        %p428 = pneg %p220
        %p429 = pneg %p217
        %p430 = pneg %p241
        %p431 = pneg %p238
        %p432 = pneg %p262
        %p433 = pneg %p259
        %p434 = pneg %p283
        %p435 = pneg %p280
        %p437 = scmp.eq.s32.totalorder %s36, 0
        // Predicated region
        $region85: #{tpu_custom_call.1} parent=63 // pred_check
          %p438 = pneg %p437
        $region86: #{tpu_custom_call.1} parent=63 // pred_check_branch
          %440 = sbr.rel (%p438) target = $region88
        $region87: #{tpu_custom_call.1} parent=63 // pred_region
          %v441 = vld [vmem:[#allocation10] sm:$0xff]
          %v442 = vld [vmem:[#allocation10 + $0x8] sm:$0xff]
          %vm443 = vcmask 261120
          %444 = vst.msk [vmem:[#allocation19] sm:$0xff] %vm443, %v441
          %445 = vst.msk [vmem:[#allocation19 + $0x8] sm:$0xff] %vm443, %v442
          %v446 = vld [vmem:[#allocation13] sm:$0xff]
          %v447 = vld [vmem:[#allocation13 + $0x8] sm:$0xff]
          %v448 = vld [vmem:[#allocation13 + $0x10] sm:$0xff]
          %v449 = vld [vmem:[#allocation13 + $0x18] sm:$0xff]
          %v450 = vld [vmem:[#allocation16] sm:$0xff]
          %v451 = vld [vmem:[#allocation16 + $0x8] sm:$0xff]
          %v452 = vld [vmem:[#allocation16 + $0x10] sm:$0xff]
          %v453 = vld [vmem:[#allocation16 + $0x18] sm:$0xff]
          %v454 = vpack.c.bf16 %v447, %v446
          %v455 = vpack.c.bf16 %v449, %v448
          %v456 = vpack.c.bf16 %v451, %v450
          %v457 = vpack.c.bf16 %v453, %v452
          %v458 = vld [vmem:[%s6] sm:$0x1]
          %v460 = vlaneseq
          %v461 = vshrl.u32 %v460, 7
          %v462 = vsub.s32 0, %v461
          %v463 = vrot.slane %v458, %v462
          %v466 = vsel %vm443, %v454, 0
          %v469 = vsel %vm443, %v455, 0
          %471 = vmatprep.subr.bf16.mxu0 0
          %472 = vmatpush1.bf16.msra.mxu0 0
          %473 = vmatprep.subr.bf16.mxu0 0
          %474 = vmatpush1.bf16.msra.mxu0 0
          %475 = vmatprep.subr.bf16.mxu0 0
          %476 = vmatpush1.bf16.msra.mxu0 0
          %477 = vmatprep.subr.bf16.mxu0 0
          %478 = vmatpush1.bf16.msra.mxu0 0
          %479 = vmatprep.subr.bf16.mxu0 0
          %480 = vmatpush1.bf16.msra.mxu0 0
          %481 = vmatprep.subr.bf16.mxu0 0
          %482 = vmatpush1.bf16.msra.mxu0 0
          %483 = vmatprep.subr.bf16.mxu0 0
          %484 = vmatpush1.bf16.msra.mxu0 %v457
          %485 = vmatprep.subr.bf16.mxu0 0
          %486 = vmatpush1.bf16.msra.mxu0 %v456
          %487 = vmatprep.subr.bf16.mxu0 0
          %488 = vmatpush2.bf16.msra.mxu0 0
          %489 = vmatprep.subr.bf16.mxu0 0
          %490 = vmatpush2.bf16.msra.mxu0 0
          %491 = vmatprep.subr.bf16.mxu0 0
          %492 = vmatpush2.bf16.msra.mxu0 0
          %493 = vmatprep.subr.bf16.mxu0 0
          %494 = vmatpush2.bf16.msra.mxu0 0
          %495 = vmatprep.subr.bf16.mxu0 0
          %496 = vmatpush2.bf16.msra.mxu0 0
          %497 = vmatprep.subr.bf16.mxu0 0
          %498 = vmatpush2.bf16.msra.mxu0 0
          %499 = vmatprep.subr.bf16.mxu0 0
          %500 = vmatpush2.bf16.msra.mxu0 0
          %501 = vmatprep.subr.bf16.mxu0 0
          %502 = vmatpush2.bf16.msra.mxu0 0
          %503 = vmatprep.mubr.bf16.mxu0 0
          %504 = vmatmul.mubr.bf16.gmra.mxu0 %v466
          %v505 = vpop.f32.mrf.mxu0
          %v506 = vadd.f32 %v463, %v505
          %v507 = vpop.f32.mrf.mxu0
          %v508 = vpop.f32.mrf.mxu0
          %v509 = vadd.f32 %v463, %v508
          %v510 = vpop.f32.mrf.mxu0
          %511 = vmatprep.mubr.bf16.mxu0 0
          %512 = vmatmul.mubr.bf16.gmra.mxu0 %v469
          %v513 = vpop.f32.mrf.mxu0
          %v514 = vadd.f32 %v463, %v513
          %v515 = vpop.f32.mrf.mxu0
          %v516 = vpop.f32.mrf.mxu0
          %v517 = vadd.f32 %v463, %v516
          %v518 = vpop.f32.mrf.mxu0
          %519 = vdwg.mxu0
          %520 = vst.msk [vmem:[#allocation2] sm:$0xff] %vm443, %v506
          %521 = vst.msk [vmem:[#allocation2 + $0x8] sm:$0xff] %vm443, %v509
          %522 = vst.msk [vmem:[#allocation2 + $0x10] sm:$0xff] %vm443, %v514
          %523 = vst.msk [vmem:[#allocation2 + $0x18] sm:$0xff] %vm443, %v517
        $region88: #{tpu_custom_call.1} parent=63 // pred_fallthru
          _
        %v524 = vld [vmem:[#allocation19] sm:$0xff]
        %v525 = vld [vmem:[#allocation19 + $0x8] sm:$0xff]
        %v526 = vld [vmem:[#allocation15] sm:$0xff]
        %v527 = vld [vmem:[#allocation15 + $0x8] sm:$0xff]
        %v528 = vld [vmem:[#allocation15 + $0x10] sm:$0xff]
        %v529 = vld [vmem:[#allocation15 + $0x18] sm:$0xff]
        %v530 = vpack.c.bf16 %v525, %v524
        %v531 = vpack.c.bf16 %v527, %v526
        %v532 = vpack.c.bf16 %v529, %v528
        %vm533 = vcmask 261120
        %v535 = vsel %vm533, %v530, 0
        %537 = vmatprep.subr.bf16.mxu0 0
        %538 = vmatpush1.bf16.msra.mxu0 0
        %539 = vmatprep.subr.bf16.mxu0 0
        %540 = vmatpush1.bf16.msra.mxu0 0
        %541 = vmatprep.subr.bf16.mxu0 0
        %542 = vmatpush1.bf16.msra.mxu0 0
        %543 = vmatprep.subr.bf16.mxu0 0
        %544 = vmatpush1.bf16.msra.mxu0 0
        %545 = vmatprep.subr.bf16.mxu0 0
        %546 = vmatpush1.bf16.msra.mxu0 0
        %547 = vmatprep.subr.bf16.mxu0 0
        %548 = vmatpush1.bf16.msra.mxu0 0
        %549 = vmatprep.subr.bf16.mxu0 0
        %550 = vmatpush1.bf16.msra.mxu0 %v532
        %551 = vmatprep.subr.bf16.mxu0 0
        %552 = vmatpush1.bf16.msra.mxu0 %v531
        %553 = vmatprep.subr.bf16.mxu0 0
        %554 = vmatpush2.bf16.msra.mxu0 0
        %555 = vmatprep.subr.bf16.mxu0 0
        %556 = vmatpush2.bf16.msra.mxu0 0
        %557 = vmatprep.subr.bf16.mxu0 0
        %558 = vmatpush2.bf16.msra.mxu0 0
        %559 = vmatprep.subr.bf16.mxu0 0
        %560 = vmatpush2.bf16.msra.mxu0 0
        %561 = vmatprep.subr.bf16.mxu0 0
        %562 = vmatpush2.bf16.msra.mxu0 0
        %563 = vmatprep.subr.bf16.mxu0 0
        %564 = vmatpush2.bf16.msra.mxu0 0
        %565 = vmatprep.subr.bf16.mxu0 0
        %566 = vmatpush2.bf16.msra.mxu0 0
        %567 = vmatprep.subr.bf16.mxu0 0
        %568 = vmatpush2.bf16.msra.mxu0 0
        %569 = vmatprep.mubr.bf16.mxu0 0
        %570 = vmatmul.mubr.bf16.gmra.mxu0 %v535
        %v571 = vpop.f32.mrf.mxu0
        %v572 = vadd.f32 0.0, %v571
        %v573 = vpop.f32.mrf.mxu0
        %v574 = vpop.f32.mrf.mxu0
        %v575 = vadd.f32 0.0, %v574
        %v576 = vpop.f32.mrf.mxu0
        %577 = vdwg.mxu0
        %vm578 = vcmask 523264
        %579 = vst.msk [vmem:[#allocation3] sm:$0xff] %vm578, %v572
        %580 = vst.msk [vmem:[#allocation3 + $0x8] sm:$0xff] %vm578, %v575
        loop: start=0, step=1, limit=32
        $region89: #{tpu_custom_call.1} parent=63 // loop_pre_header
          _
        $region90: #{tpu_custom_call.1} parent=63 // loop_header
          %s582 = sphi 0, %s586
          %p583 = scmp.ge.s32.totalorder %s582, 32
        $region91: #{tpu_custom_call.1} parent=63 // loop_header_branch
          %585 = sbr.rel (%p583) target = $region95
        $region92: #{tpu_custom_call.1} parent=63 // loop_body
          %s587 = sld [smem:[#allocation9 + %s582]]
          %s588 = sld [smem:[#allocation8 + %s582]]
          %s589 = scalar_lea.vmem [#allocation3], %s587
          %v590 = vld [vmem:[%s589] sm:$0x1]
          %s591 = scalar_lea.vmem [#allocation3], %s588
          %v592 = vld [vmem:[%s591] sm:$0x1]
          %594 = vrot.lane.b32.xlu0 %v592, 96
          %v595 = vpop.permute.xlu0 %594
          %v597 = vadd.f32 %v590, %v595
          %s598 = scalar_lea.vmem [#allocation4], %s582
          %vm599 = vcmask 253952
          %600 = vst.msk [vmem:[%s598] sm:$0x1] %vm599, %v597
        $region93: #{tpu_custom_call.1} parent=63 // loop_footer
          %s586 = sadd.s32 1, %s582
        $region94: #{tpu_custom_call.1} parent=63 // loop_footer_branch
          %581 = sbr.rel target = $region90
        $region95: #{tpu_custom_call.1} parent=63 // loop_exit
          _
        %v601 = vld [vmem:[#allocation4] sm:$0xff]
        %v602 = vld [vmem:[#allocation4 + $0x8] sm:$0xff]
        %v603 = vld [vmem:[#allocation4 + $0x10] sm:$0xff]
        %v604 = vld [vmem:[#allocation4 + $0x18] sm:$0xff]
        %v605 = vld [vmem:[#allocation2] sm:$0xff]
        %v606 = vld [vmem:[#allocation2 + $0x8] sm:$0xff]
        %v607 = vld [vmem:[#allocation2 + $0x10] sm:$0xff]
        %v608 = vld [vmem:[#allocation2 + $0x18] sm:$0xff]
        %v609 = vadd.f32 %v601, %v605
        %v610 = vadd.f32 %v602, %v606
        %v611 = vadd.f32 %v603, %v607
        %v612 = vadd.f32 %v604, %v608
        %v613 = vld [vmem:[%s7] sm:$0x1]
        %v614 = vld [vmem:[%s8] sm:$0x1]
        %v615 = vsel %vm533, %v609, 0.0
        %616 = vadd.xlane.f32.xlu0 %v615
        %v617 = vpop.xlane.xlu0 %616
        %v618 = vsel %vm533, %v610, 0.0
        %619 = vadd.xlane.f32.xlu0 %v618
        %v620 = vpop.xlane.xlu0 %619
        %v621 = vsel %vm533, %v611, 0.0
        %622 = vadd.xlane.f32.xlu0 %v621
        %v623 = vpop.xlane.xlu0 %622
        %v624 = vsel %vm533, %v612, 0.0
        %625 = vadd.xlane.f32.xlu0 %v624
        %v626 = vpop.xlane.xlu0 %625
        %v627 = vrcp.pop 32.0
        %v628 = vmul.f32 %v617, %v627
        %v629 = vmul.f32 %v620, %v627
        %v630 = vmul.f32 %v623, %v627
        %v631 = vmul.f32 %v626, %v627
        %v632 = vsub.f32 %v609, %v628
        %v633 = vsub.f32 %v610, %v629
        %v634 = vsub.f32 %v611, %v630
        %v635 = vsub.f32 %v612, %v631
        %v636 = vmul.f32 %v632, %v632
        %v637 = vmul.f32 %v633, %v633
        %v638 = vmul.f32 %v634, %v634
        %v639 = vmul.f32 %v635, %v635
        %v640 = vsel %vm533, %v636, 0.0
        %641 = vadd.xlane.f32.xlu0 %v640
        %v642 = vpop.xlane.xlu0 %641
        %v643 = vsel %vm533, %v637, 0.0
        %644 = vadd.xlane.f32.xlu0 %v643
        %v645 = vpop.xlane.xlu0 %644
        %v646 = vsel %vm533, %v638, 0.0
        %647 = vadd.xlane.f32.xlu0 %v646
        %v648 = vpop.xlane.xlu0 %647
        %v649 = vsel %vm533, %v639, 0.0
        %650 = vadd.xlane.f32.xlu0 %v649
        %v651 = vpop.xlane.xlu0 %650
        %v652 = vmul.f32 %v642, %v627
        %v653 = vmul.f32 %v645, %v627
        %v654 = vmul.f32 %v648, %v627
        %v655 = vmul.f32 %v651, %v627
        %v656 = vadd.f32 %v652, 1e-05
        %v657 = vadd.f32 %v653, 1e-05
        %v658 = vadd.f32 %v654, 1e-05
        %v659 = vadd.f32 %v655, 1e-05
        %v660 = vrsqrt.pop %v656
        %v661 = vrsqrt.pop %v657
        %v662 = vrsqrt.pop %v658
        %v663 = vrsqrt.pop %v659
        %v664 = vmul.f32 %v632, %v660
        %v665 = vmul.f32 %v633, %v661
        %v666 = vmul.f32 %v634, %v662
        %v667 = vmul.f32 %v635, %v663
        %v669 = vlaneseq
        %v670 = vshrl.u32 %v669, 7
        %v671 = vsub.s32 0, %v670
        %v672 = vrot.slane %v613, %v671
        %v674 = vmul.f32 %v664, %v672
        %v675 = vmul.f32 %v665, %v672
        %v676 = vmul.f32 %v666, %v672
        %v677 = vmul.f32 %v667, %v672
        %v679 = vlaneseq
        %v680 = vshrl.u32 %v679, 7
        %v681 = vsub.s32 0, %v680
        %v682 = vrot.slane %v614, %v681
        %v684 = vadd.f32 %v674, %v682
        %v685 = vadd.f32 %v675, %v682
        %v686 = vadd.f32 %v676, %v682
        %v687 = vadd.f32 %v677, %v682
        %v688 = vmax.f32 %v684, 0.0
        %v689 = vmax.f32 %v685, 0.0
        %v690 = vmax.f32 %v686, 0.0
        %v691 = vmax.f32 %v687, 0.0
        %v692 = vld [vmem:[#allocation18] sm:$0xff]
        %v693 = vld [vmem:[#allocation18 + $0x8] sm:$0xff]
        %v694 = vld [vmem:[#allocation18 + $0x10] sm:$0xff]
        %v695 = vld [vmem:[#allocation18 + $0x18] sm:$0xff]
        %v696 = vpack.c.bf16 %v689, %v688
        %v697 = vpack.c.bf16 %v691, %v690
        %v698 = vpack.c.bf16 %v693, %v692
        %v699 = vpack.c.bf16 %v695, %v694
        %v700 = vld [vmem:[%s10] sm:$0x1]
        %v702 = vlaneseq
        %v703 = vshrl.u32 %v702, 7
        %v704 = vsub.s32 0, %v703
        %v705 = vrot.slane %v700, %v704
        %v708 = vsel %vm533, %v696, 0
        %v711 = vsel %vm533, %v697, 0
        %713 = vmatprep.subr.bf16.mxu0 0
        %714 = vmatpush1.bf16.msra.mxu0 0
        %715 = vmatprep.subr.bf16.mxu0 0
        %716 = vmatpush1.bf16.msra.mxu0 0
        %717 = vmatprep.subr.bf16.mxu0 0
        %718 = vmatpush1.bf16.msra.mxu0 0
        %719 = vmatprep.subr.bf16.mxu0 0
        %720 = vmatpush1.bf16.msra.mxu0 0
        %721 = vmatprep.subr.bf16.mxu0 0
        %722 = vmatpush1.bf16.msra.mxu0 0
        %723 = vmatprep.subr.bf16.mxu0 0
        %724 = vmatpush1.bf16.msra.mxu0 0
        %725 = vmatprep.subr.bf16.mxu0 0
        %726 = vmatpush1.bf16.msra.mxu0 %v699
        %727 = vmatprep.subr.bf16.mxu0 0
        %728 = vmatpush1.bf16.msra.mxu0 %v698
        %729 = vmatprep.subr.bf16.mxu0 0
        %730 = vmatpush2.bf16.msra.mxu0 0
        %731 = vmatprep.subr.bf16.mxu0 0
        %732 = vmatpush2.bf16.msra.mxu0 0
        %733 = vmatprep.subr.bf16.mxu0 0
        %734 = vmatpush2.bf16.msra.mxu0 0
        %735 = vmatprep.subr.bf16.mxu0 0
        %736 = vmatpush2.bf16.msra.mxu0 0
        %737 = vmatprep.subr.bf16.mxu0 0
        %738 = vmatpush2.bf16.msra.mxu0 0
        %739 = vmatprep.subr.bf16.mxu0 0
        %740 = vmatpush2.bf16.msra.mxu0 0
        %741 = vmatprep.subr.bf16.mxu0 0
        %742 = vmatpush2.bf16.msra.mxu0 0
        %743 = vmatprep.subr.bf16.mxu0 0
        %744 = vmatpush2.bf16.msra.mxu0 0
        %745 = vmatprep.mubr.bf16.mxu0 0
        %746 = vmatmul.mubr.bf16.gmra.mxu0 %v708
        %v747 = vpop.f32.mrf.mxu0
        %v748 = vadd.f32 %v705, %v747
        %v749 = vpop.f32.mrf.mxu0
        %v750 = vpop.f32.mrf.mxu0
        %v751 = vadd.f32 %v705, %v750
        %v752 = vpop.f32.mrf.mxu0
        %753 = vmatprep.mubr.bf16.mxu0 0
        %754 = vmatmul.mubr.bf16.gmra.mxu0 %v711
        %v755 = vpop.f32.mrf.mxu0
        %v756 = vadd.f32 %v705, %v755
        %v757 = vpop.f32.mrf.mxu0
        %v758 = vpop.f32.mrf.mxu0
        %v759 = vadd.f32 %v705, %v758
        %v760 = vpop.f32.mrf.mxu0
        %761 = vdwg.mxu0
        %762 = vst.msk [vmem:[#allocation5] sm:$0xff] %vm533, %v748
        %763 = vst.msk [vmem:[#allocation5 + $0x8] sm:$0xff] %vm533, %v751
        %764 = vst.msk [vmem:[#allocation5 + $0x10] sm:$0xff] %vm533, %v756
        %765 = vst.msk [vmem:[#allocation5 + $0x18] sm:$0xff] %vm533, %v759
        %766 = vst.msk [vmem:[#allocation6] sm:$0xff] %vm533, 0.0
        %767 = vst.msk [vmem:[#allocation6 + $0x8] sm:$0xff] %vm533, 0.0
        loop: start=0, step=1, limit=32
        $region96: #{tpu_custom_call.1} parent=63 // loop_pre_header
          _
        $region97: #{tpu_custom_call.1} parent=63 // loop_header
          %s769 = sphi 0, %s773
          %p770 = scmp.ge.s32.totalorder %s769, 32
        $region98: #{tpu_custom_call.1} parent=63 // loop_header_branch
          %772 = sbr.rel (%p770) target = $region102
        $region99: #{tpu_custom_call.1} parent=63 // loop_body
          %s774 = sld [smem:[#allocation9 + %s769]]
          %s775 = scalar_lea.vmem [#allocation6], %s774
          %v776 = vld [vmem:[%s775] sm:$0x1]
          %s777 = scalar_lea.vmem [#allocation5], %s769
          %v778 = vld [vmem:[%s777] sm:$0x1]
          %v779 = vadd.f32 %v776, %v778
          %vm780 = vcmask 253952
          %781 = vst.msk [vmem:[%s775] sm:$0x1] %vm780, %v779
        $region100: #{tpu_custom_call.1} parent=63 // loop_footer
          %s773 = sadd.s32 1, %s769
        $region101: #{tpu_custom_call.1} parent=63 // loop_footer_branch
          %768 = sbr.rel target = $region97
        $region102: #{tpu_custom_call.1} parent=63 // loop_exit
          _
        %v782 = vld [vmem:[#allocation6] sm:$0xff]
        %v783 = vld [vmem:[#allocation6 + $0x8] sm:$0xff]
        %v784 = vadd.f32 %v524, %v782
        %v785 = vadd.f32 %v525, %v783
        %v786 = vld [vmem:[%s11] sm:$0x1]
        %v787 = vld [vmem:[%s12] sm:$0x1]
        %v788 = vsel %vm533, %v784, 0.0
        %789 = vadd.xlane.f32.xlu0 %v788
        %v790 = vpop.xlane.xlu0 %789
        %v791 = vsel %vm533, %v785, 0.0
        %792 = vadd.xlane.f32.xlu0 %v791
        %v793 = vpop.xlane.xlu0 %792
        %v794 = vmul.f32 %v790, %v627
        %v795 = vmul.f32 %v793, %v627
        %v796 = vsub.f32 %v784, %v794
        %v797 = vsub.f32 %v785, %v795
        %v798 = vmul.f32 %v796, %v796
        %v799 = vmul.f32 %v797, %v797
        %v800 = vsel %vm533, %v798, 0.0
        %801 = vadd.xlane.f32.xlu0 %v800
        %v802 = vpop.xlane.xlu0 %801
        %v803 = vsel %vm533, %v799, 0.0
        %804 = vadd.xlane.f32.xlu0 %v803
        %v805 = vpop.xlane.xlu0 %804
        %v806 = vmul.f32 %v802, %v627
        %v807 = vmul.f32 %v805, %v627
        %v808 = vadd.f32 %v806, 1e-05
        %v809 = vadd.f32 %v807, 1e-05
        %v810 = vrsqrt.pop %v808
        %v811 = vrsqrt.pop %v809
        %v812 = vmul.f32 %v796, %v810
        %v813 = vmul.f32 %v797, %v811
        %v815 = vlaneseq
        %v816 = vshrl.u32 %v815, 7
        %v817 = vsub.s32 0, %v816
        %v818 = vrot.slane %v786, %v817
        %v820 = vmul.f32 %v812, %v818
        %v821 = vmul.f32 %v813, %v818
        %v823 = vlaneseq
        %v824 = vshrl.u32 %v823, 7
        %v825 = vsub.s32 0, %v824
        %v826 = vrot.slane %v787, %v825
        %v828 = vadd.f32 %v820, %v826
        %v829 = vadd.f32 %v821, %v826
        %830 = vst.msk [vmem:[#allocation19] sm:$0xff] %vm533, %v828
        %831 = vst.msk [vmem:[#allocation19 + $0x8] sm:$0xff] %vm533, %v829
        // Predicated region
        $region103: #{tpu_custom_call.1} parent=63 // pred_check
          %p832 = pneg %p280
        $region104: #{tpu_custom_call.1} parent=63 // pred_check_branch
          %834 = sbr.rel (%p832) target = $region106
        $region105: #{tpu_custom_call.1} parent=63 // pred_region
          %s836 = ssub.s32 256, 256
          %837 = vsyncadd [#allocation12], %s836
          %s838 = sshll.u32 [#allocation19], 4
          %s839 = int_to_ptr.vmem [resolvable:$true] %s838
          %844 = dma.vmem_to_hbm [thread:$0]  %s839, 256, %s13, [#allocation12], 128, 128, 8
        $region106: #{tpu_custom_call.1} parent=63 // pred_fallthru
          _
        // Predicated region
        $region107: #{tpu_custom_call.1} parent=63 // pred_check
          %p845 = pneg %p280
        $region108: #{tpu_custom_call.1} parent=63 // pred_check_branch
          %847 = sbr.rel (%p845) target = $region110
        $region109: #{tpu_custom_call.1} parent=63 // pred_region
          %848 = dma.done [#allocation12], 256
        $region110: #{tpu_custom_call.1} parent=63 // pred_fallthru
          _
      $region64: #{tpu_custom_call.1} parent=5 // pred_fallthru
        _
      %p849 = scmp.le.s32.totalorder 2, %s31
      // Predicated region
      $region111: #{tpu_custom_call.1} parent=5 // pred_check
        %p850 = pneg %p849
      $region112: #{tpu_custom_call.1} parent=5 // pred_check_branch
        %852 = sbr.rel (%p850) target = $region114
      $region113: #{tpu_custom_call.1} parent=5 // pred_region
        %s853 = ssub.s32 %s31, 2
      $region114: #{tpu_custom_call.1} parent=5 // pred_fallthru
        _
    $region6: #{tpu_custom_call.1} parent=1 // loop_footer
      %s35 = sadd.s32 1, %s31
    $region7: #{tpu_custom_call.1} parent=1 // loop_footer_branch
      %30 = sbr.rel target = $region3
    $region8: #{tpu_custom_call.1} parent=1 // loop_exit
      _
    %854 = vsyncpa [#allocation11], 1
    %s855 = scalar_lea.sflag [#allocation11], 1
    %856 = vsyncpa %s855, 1
    %857 = vsyncpa [#allocation14], 1
    %858 = vsyncpa [#allocation17], 1
    %859 = vsyncpa [#allocation12], 1
    %s860 = scalar_lea.sflag [#allocation12], 1
    %861 = vsyncpa %s860, 1

</llo_original>
